<compile_context>
chip_gen: v7x
topology: tpu7x:2x2x1
jax: 0.10.0
libtpu: 0.0.40
codegen_flags: <defaults>
</compile_context>

<pallas_src>
import functools
import math

import jax
import jax.numpy as jnp
from jax.experimental import pallas as pl
from jax.experimental.pallas import tpu as pltpu


def _round_up(x, m):
    return ((x + m - 1) // m) * m


def _pick_block(n, candidates, fallback):
    for c in candidates:
        if n % c == 0:
            return c
    return fallback


# ---------------------------------------------------------------------------
# 1) Fused QKV projection, output written head-major: [B, 3H, S_pad, hd].
#    Grid = (batch, row-block, plane-group); the x row tile stays resident
#    across the plane-group axis, per-plane weight blocks stream.
# ---------------------------------------------------------------------------
def _qkv_kernel(x_ref, w_ref, o_ref, *, group):
    x = x_ref[...]
    for i in range(group):  # static unroll over heads/planes in this group
        o_ref[i] = jnp.dot(x, w_ref[i],
                           preferred_element_type=jnp.float32).astype(o_ref.dtype)


def _qkv_projection(x, w3, *, num_heads, head_dim, out_dtype):
    B, S_pad, in_dim = x.shape
    n_planes = w3.shape[0]                      # == 3 * num_heads
    tm = _pick_block(S_pad, (512, 256, 128, 64, 32, 16, 8), S_pad)

    # Pack several heads per grid step (wider effective N, fewer grid steps).
    group = 1
    for g in range(min(num_heads, max(1, 256 // head_dim)), 0, -1):
        if num_heads % g == 0:
            group = g
            break

    grid = (B, S_pad // tm, n_planes // group)
    cost = pl.CostEstimate(
        flops=2 * B * S_pad * in_dim * n_planes * head_dim,
        transcendentals=0,
        bytes_accessed=(B * S_pad * in_dim + n_planes * in_dim * head_dim
                        + B * S_pad * n_planes * head_dim) * x.dtype.itemsize)

    return pl.pallas_call(
        functools.partial(_qkv_kernel, group=group),
        out_shape=jax.ShapeDtypeStruct((B, n_planes, S_pad, head_dim), out_dtype),
        grid=grid,
        in_specs=[
            pl.BlockSpec((None, tm, in_dim), lambda b, m, j: (b, m, 0)),
            pl.BlockSpec((group, in_dim, head_dim), lambda b, m, j: (j, 0, 0)),
        ],
        out_specs=pl.BlockSpec((None, group, tm, head_dim),
                               lambda b, m, j: (b, j, m, 0)),
        compiler_params=pltpu.CompilerParams(
            dimension_semantics=("parallel", "parallel", "parallel"),
            vmem_limit_bytes=32 * 1024 * 1024),
        cost_estimate=cost,
    )(x, w3)


# ---------------------------------------------------------------------------
# 2) Flash-style causal attention: grid = (batch, head, q-block, k-block).
#    q/k/v all come from the single [B, 3H, S_pad, hd] tensor.
# ---------------------------------------------------------------------------
def _flash_attn_kernel(q_ref, k_ref, v_ref, o_ref, m_sc, l_sc, acc_sc):
    qi = pl.program_id(2)
    ki = pl.program_id(3)

    @pl.when(ki == 0)
    def _init():
        m_sc[...] = jnp.full(m_sc.shape, -jnp.inf, jnp.float32)
        l_sc[...] = jnp.zeros(l_sc.shape, jnp.float32)
        acc_sc[...] = jnp.zeros(acc_sc.shape, jnp.float32)

    def _accumulate(masked):
        # Scale already folded into the Q projection weights (wrapper side).
        s = jax.lax.dot_general(q_ref[...], k_ref[...], (((1,), (1,)), ((), ())),
                                preferred_element_type=jnp.float32)
        if masked:
            # Diagonal block only: q_start == k_start (block_q == block_k), so
            # the causal condition is purely intra-block.
            row = jax.lax.broadcasted_iota(jnp.int32, s.shape, 0)
            col = jax.lax.broadcasted_iota(jnp.int32, s.shape, 1)
            s = jnp.where(col > row, -1e30, s)        # finite mask (NaN-safe)
        m_prev = m_sc[...]
        m_new = jnp.maximum(m_prev, jnp.max(s, axis=-1, keepdims=True))
        alpha = jnp.exp(m_prev - m_new)
        p = jnp.exp(s - m_new)
        l_sc[...] = alpha * l_sc[...] + jnp.sum(p, axis=-1, keepdims=True)
        acc_sc[...] = alpha * acc_sc[...] + jnp.dot(
            p.astype(v_ref.dtype), v_ref[...], preferred_element_type=jnp.float32)
        m_sc[...] = m_new

    @pl.when(ki < qi)          # fully below diagonal: no masking work at all
    def _off_diag():
        _accumulate(False)

    @pl.when(ki == qi)         # diagonal block: the only one that needs a mask
    def _diag():
        _accumulate(True)

    # ki > qi: fully masked -> compute skipped; the clamped K/V index_maps in
    # _attention also suppress their DMA for these steps.

    @pl.when(ki == pl.num_programs(3) - 1)
    def _finalize():
        inv_l = pl.reciprocal(l_sc[...], approx=True)   # EUP slot
        o_ref[...] = (acc_sc[...] * inv_l).astype(o_ref.dtype)


def _attention(qkv, *, num_heads, head_dim, block, out_dtype):
    B, n_planes, S_pad, hd = qkv.shape
    H = num_heads
    nq = S_pad // block
    nk = S_pad // block

    q_spec = pl.BlockSpec((None, None, block, hd),
                          lambda b, h, qi, ki: (b, h, qi, 0))
    # Clamp ki so causally-skipped key blocks re-use the resident block (no DMA).
    k_spec = pl.BlockSpec((None, None, block, hd),
                          lambda b, h, qi, ki: (b, H + h, jnp.minimum(qi, ki), 0))
    v_spec = pl.BlockSpec((None, None, block, hd),
                          lambda b, h, qi, ki: (b, 2 * H + h, jnp.minimum(qi, ki), 0))

    cost = pl.CostEstimate(
        flops=2 * B * H * S_pad * S_pad * hd,               # causal ~half of 4*
        transcendentals=B * H * S_pad * S_pad // 2,
        bytes_accessed=4 * B * H * S_pad * hd * qkv.dtype.itemsize)

    return pl.pallas_call(
        _flash_attn_kernel,
        out_shape=jax.ShapeDtypeStruct((B, H, S_pad, hd), out_dtype),
        grid_spec=pltpu.PrefetchScalarGridSpec(
            num_scalar_prefetch=0,
            grid=(B, H, nq, nk),
            in_specs=[q_spec, k_spec, v_spec],
            out_specs=pl.BlockSpec((None, None, block, hd),
                                   lambda b, h, qi, ki: (b, h, qi, 0)),
            scratch_shapes=[
                pltpu.VMEM((block, 1), jnp.float32),    # running max
                pltpu.VMEM((block, 1), jnp.float32),    # running denom
                pltpu.VMEM((block, hd), jnp.float32),   # un-normalized ctx
            ],
        ),
        compiler_params=pltpu.CompilerParams(
            dimension_semantics=("parallel", "parallel", "parallel", "arbitrary"),
            vmem_limit_bytes=32 * 1024 * 1024),
        cost_estimate=cost,
    )(qkv, qkv, qkv)


# ---------------------------------------------------------------------------
# 3) Output projection (+bias): consumes ctx in [B, H, S_pad, hd] layout and
#    contracts per head (static loop), so no ctx transpose is needed.
# ---------------------------------------------------------------------------
def _out_proj_kernel(ctx_ref, w_ref, b_ref, o_ref, *, num_heads):
    acc = jnp.dot(ctx_ref[0], w_ref[0], preferred_element_type=jnp.float32)
    for h in range(1, num_heads):
        acc = acc + jnp.dot(ctx_ref[h], w_ref[h],
                            preferred_element_type=jnp.float32)
    o_ref[...] = (acc + b_ref[...]).astype(o_ref.dtype)


def _out_projection(ctx, wo3, bias, *, out_dtype):
    B, H, S_pad, hd = ctx.shape
    N = wo3.shape[-1]
    tm = _pick_block(S_pad, (512, 256, 128, 64, 32, 16, 8), S_pad)
    tn = _pick_block(N, (512, 256, 128), N)
    grid = (B, S_pad // tm, N // tn)

    cost = pl.CostEstimate(
        flops=2 * B * S_pad * H * hd * N, transcendentals=0,
        bytes_accessed=(B * H * S_pad * hd + H * hd * N) * ctx.dtype.itemsize
        + B * S_pad * N * jnp.dtype(out_dtype).itemsize)

    return pl.pallas_call(
        functools.partial(_out_proj_kernel, num_heads=H),
        out_shape=jax.ShapeDtypeStruct((B, S_pad, N), out_dtype),
        grid=grid,
        in_specs=[
            pl.BlockSpec((None, H, tm, hd), lambda b, m, n: (b, 0, m, 0)),
            pl.BlockSpec((H, hd, tn), lambda b, m, n: (0, 0, n)),
            pl.BlockSpec((1, tn), lambda b, m, n: (0, n)),
        ],
        out_specs=pl.BlockSpec((None, tm, tn), lambda b, m, n: (b, m, n)),
        compiler_params=pltpu.CompilerParams(
            dimension_semantics=("parallel", "parallel", "parallel"),
            vmem_limit_bytes=32 * 1024 * 1024),
        cost_estimate=cost,
    )(ctx, wo3, bias)


# ---------------------------------------------------------------------------
# Full forward pass (eval mode, no KV-cache path).
# ---------------------------------------------------------------------------
def multi_head_attention(x, wq, wk, wv, wo, bo, *, num_heads,
                         block_q=256, block_k=256, mxu_dtype=jnp.bfloat16):
    assert block_q == block_k, "causal block-skip logic assumes square blocks"
    B, S, in_dim = x.shape
    out_dim = wq.shape[1]
    head_dim = out_dim // num_heads
    out_dtype = x.dtype

    # Sequence blocking: pad S to a multiple of one attention block (>= 8).
    blk = min(block_q, _round_up(S, 8))
    S_pad = _round_up(S, blk)
    if S_pad != S:
        x = jnp.pad(x, ((0, 0), (0, S_pad - S), (0, 0)))

    # ---- 1) fused QKV projection (scale folded into Wq, head-major output) --
    scale = 1.0 / math.sqrt(head_dim)
    w_qkv = jnp.concatenate([wq * scale, wk, wv], axis=1)           # [K, 3*out]
    w3 = (w_qkv.reshape(in_dim, 3, num_heads, head_dim)
               .transpose(1, 2, 0, 3)
               .reshape(3 * num_heads, in_dim, head_dim)).astype(mxu_dtype)
    qkv = _qkv_projection(x.astype(mxu_dtype), w3, num_heads=num_heads,
                          head_dim=head_dim, out_dtype=mxu_dtype)
    # qkv: [B, 3H, S_pad, hd] -- no activation transposes anywhere.

    # ---- 2) flash-style causal attention ------------------------------------
    # TODO(synk): attention dropout (p=0.1) omitted -> eval()-mode semantics.
    ctx = _attention(qkv, num_heads=num_heads, head_dim=head_dim,
                     block=blk, out_dtype=mxu_dtype)                # [B,H,S,hd]

    # ---- 3) output projection (+bias), per-head contraction -----------------
    wo3 = wo.reshape(num_heads, head_dim, out_dim).astype(mxu_dtype)
    y = _out_projection(ctx, wo3, bo.reshape(1, out_dim).astype(jnp.float32),
                        out_dtype=out_dtype)                        # [B,S_pad,N]
    return y[:, :S, :] if S_pad != S else y


def _reference(x, wq, wk, wv, wo, bo, num_heads):
    """Pure-JAX f32 reference mirroring the PyTorch forward (eval mode)."""
    B, S, _ = x.shape
    out_dim = wq.shape[1]
    hd = out_dim // num_heads
    q = (x @ wq).reshape(B, S, num_heads, hd).transpose(0, 2, 1, 3)
    k = (x @ wk).reshape(B, S, num_heads, hd).transpose(0, 2, 1, 3)
    v = (x @ wv).reshape(B, S, num_heads, hd).transpose(0, 2, 1, 3)
    scores = jnp.einsum("bhqd,bhkd->bhqk", q, k)
    mask = jnp.triu(jnp.ones((S, S), dtype=bool), k=1)
    scores = jnp.where(mask[None, None], -jnp.inf, scores)
    w = jax.nn.softmax(scores / hd ** 0.5, axis=-1)
    ctx = jnp.einsum("bhqk,bhkd->bhqd", w, v).transpose(0, 2, 1, 3).reshape(B, S, out_dim)
    return ctx @ wo + bo


if __name__ == "__main__":
    # Small shapes consistent with the module's docstring example.
    B, S = 2, 8
    in_dim, out_dim, num_heads = 32, 64, 8

    key = jax.random.PRNGKey(0)
    kx, kq, kk, kv, ko, kb = jax.random.split(key, 6)

    x = jax.random.normal(kx, (B, S, in_dim), dtype=jnp.float32)

    # nn.Linear-style uniform init, weights stored as [in, out] (x @ W).
    bq = 1.0 / (in_dim ** 0.5)
    bo_b = 1.0 / (out_dim ** 0.5)
    wq = jax.random.uniform(kq, (in_dim, out_dim), jnp.float32, -bq, bq)
    wk = jax.random.uniform(kk, (in_dim, out_dim), jnp.float32, -bq, bq)
    wv = jax.random.uniform(kv, (in_dim, out_dim), jnp.float32, -bq, bq)
    wo = jax.random.uniform(ko, (out_dim, out_dim), jnp.float32, -bo_b, bo_b)
    bo = jax.random.uniform(kb, (1, out_dim), jnp.float32, -bo_b, bo_b)

    ref = _reference(x, wq, wk, wv, wo, bo, num_heads)

    # f32-on-MXU path: tight check vs reference (approx EUP reciprocal only).
    out_f32 = jax.block_until_ready(
        multi_head_attention(x, wq, wk, wv, wo, bo, num_heads=num_heads,
                             mxu_dtype=jnp.float32))
    assert out_f32.shape == (B, S, out_dim)
    assert jnp.allclose(out_f32, ref, atol=5e-3, rtol=5e-3), "f32 mismatch vs reference"

    # Default bf16-on-MXU path (f32 accumulation / f32 softmax): looser tol.
    out_bf16 = jax.block_until_ready(
        multi_head_attention(x, wq, wk, wv, wo, bo, num_heads=num_heads))
    assert out_bf16.shape == (B, S, out_dim)
    assert jnp.allclose(out_bf16, ref, atol=3e-2, rtol=3e-2), "bf16 mismatch vs reference"

    print("KERNEL_OK")
</pallas_src>

<mosaic_0001>
module attributes {stable_mosaic.version = 11 : i64} {
  func.func @_qkv_kernel(%arg0: i32, %arg1: i32, %arg2: i32, %arg3: memref<1x8x32xf32, #tpu.memory_space<vmem>>, %arg4: memref<8x32x8xf32, #tpu.memory_space<vmem>>, %arg5: memref<1x8x8x8xf32, #tpu.memory_space<vmem>>) attributes {dimension_semantics = [#tpu.dimension_semantics<parallel>, #tpu.dimension_semantics<parallel>, #tpu.dimension_semantics<parallel>], iteration_bounds = array<i64: 2, 1, 3>, scalar_prefetch = 0 : i64, scratch_operands = 0 : i64, tpu.core_type = #tpu.core_type<tc>, window_params = [{transform_indices = @transform_0, window_bounds = array<i64: 1, 8, 32>}, {transform_indices = @transform_1, window_bounds = array<i64: 8, 32, 8>}, {transform_indices = @transform_2, window_bounds = array<i64: 1, 8, 8, 8>}]} {
    %c0 = arith.constant 0 : index
    %c0_0 = arith.constant 0 : index
    %c0_1 = arith.constant 0 : index
    %0 = vector.load %arg3[%c0, %c0_0, %c0_1] : memref<1x8x32xf32, #tpu.memory_space<vmem>>, vector<1x8x32xf32>
    %1 = vector.shape_cast %0 : vector<1x8x32xf32> to vector<8x32xf32>
    %c0_2 = arith.constant 0 : index
    %c0_3 = arith.constant 0 : index
    %c0_4 = arith.constant 0 : index
    %2 = vector.load %arg4[%c0_2, %c0_3, %c0_4] : memref<8x32x8xf32, #tpu.memory_space<vmem>>, vector<1x32x8xf32>
    %3 = vector.shape_cast %2 : vector<1x32x8xf32> to vector<32x8xf32>
    %cst = arith.constant dense<0.000000e+00> : vector<8x8xf32>
    %4 = tpu.matmul %1, %3, %cst {dimension_numbers = #tpu.dot_dimension_numbers<[1], [0], [0], [1], [0, 0, 1, 1], [], []>} : vector<8x32xf32>, vector<32x8xf32>, vector<8x8xf32> -> vector<8x8xf32>
    %c0_5 = arith.constant 0 : index
    %c0_6 = arith.constant 0 : index
    %c0_7 = arith.constant 0 : index
    %c0_8 = arith.constant 0 : index
    %5 = vector.load %arg5[%c0_5, %c0_6, %c0_7, %c0_8] : memref<1x8x8x8xf32, #tpu.memory_space<vmem>>, vector<1x1x8x8xf32>
    %6 = vector.shape_cast %5 : vector<1x1x8x8xf32> to vector<8x8xf32>
    %7 = vector.shape_cast %4 : vector<8x8xf32> to vector<1x1x8x8xf32>
    tpu.vector_store %arg5[%c0_5, %c0_6, %c0_7, %c0_8], %7 {strides = array<i32>} : memref<1x8x8x8xf32, #tpu.memory_space<vmem>>, vector<1x1x8x8xf32>,
    %c1 = arith.constant 1 : index
    %c0_9 = arith.constant 0 : index
    %c0_10 = arith.constant 0 : index
    %8 = vector.load %arg4[%c1, %c0_9, %c0_10] : memref<8x32x8xf32, #tpu.memory_space<vmem>>, vector<1x32x8xf32>
    %9 = vector.shape_cast %8 : vector<1x32x8xf32> to vector<32x8xf32>
    %cst_11 = arith.constant dense<0.000000e+00> : vector<8x8xf32>
    %10 = tpu.matmul %1, %9, %cst_11 {dimension_numbers = #tpu.dot_dimension_numbers<[1], [0], [0], [1], [0, 0, 1, 1], [], []>} : vector<8x32xf32>, vector<32x8xf32>, vector<8x8xf32> -> vector<8x8xf32>
    %c0_12 = arith.constant 0 : index
    %c1_13 = arith.constant 1 : index
    %c0_14 = arith.constant 0 : index
    %c0_15 = arith.constant 0 : index
    %11 = vector.load %arg5[%c0_12, %c1_13, %c0_14, %c0_15] : memref<1x8x8x8xf32, #tpu.memory_space<vmem>>, vector<1x1x8x8xf32>
    %12 = vector.shape_cast %11 : vector<1x1x8x8xf32> to vector<8x8xf32>
    %13 = vector.shape_cast %10 : vector<8x8xf32> to vector<1x1x8x8xf32>
    tpu.vector_store %arg5[%c0_12, %c1_13, %c0_14, %c0_15], %13 {strides = array<i32>} : memref<1x8x8x8xf32, #tpu.memory_space<vmem>>, vector<1x1x8x8xf32>,
    %c2 = arith.constant 2 : index
    %c0_16 = arith.constant 0 : index
    %c0_17 = arith.constant 0 : index
    %14 = vector.load %arg4[%c2, %c0_16, %c0_17] : memref<8x32x8xf32, #tpu.memory_space<vmem>>, vector<1x32x8xf32>
    %15 = vector.shape_cast %14 : vector<1x32x8xf32> to vector<32x8xf32>
    %cst_18 = arith.constant dense<0.000000e+00> : vector<8x8xf32>
    %16 = tpu.matmul %1, %15, %cst_18 {dimension_numbers = #tpu.dot_dimension_numbers<[1], [0], [0], [1], [0, 0, 1, 1], [], []>} : vector<8x32xf32>, vector<32x8xf32>, vector<8x8xf32> -> vector<8x8xf32>
    %c0_19 = arith.constant 0 : index
    %c2_20 = arith.constant 2 : index
    %c0_21 = arith.constant 0 : index
    %c0_22 = arith.constant 0 : index
    %17 = vector.load %arg5[%c0_19, %c2_20, %c0_21, %c0_22] : memref<1x8x8x8xf32, #tpu.memory_space<vmem>>, vector<1x1x8x8xf32>
    %18 = vector.shape_cast %17 : vector<1x1x8x8xf32> to vector<8x8xf32>
    %19 = vector.shape_cast %16 : vector<8x8xf32> to vector<1x1x8x8xf32>
    tpu.vector_store %arg5[%c0_19, %c2_20, %c0_21, %c0_22], %19 {strides = array<i32>} : memref<1x8x8x8xf32, #tpu.memory_space<vmem>>, vector<1x1x8x8xf32>,
    %c3 = arith.constant 3 : index
    %c0_23 = arith.constant 0 : index
    %c0_24 = arith.constant 0 : index
    %20 = vector.load %arg4[%c3, %c0_23, %c0_24] : memref<8x32x8xf32, #tpu.memory_space<vmem>>, vector<1x32x8xf32>
    %21 = vector.shape_cast %20 : vector<1x32x8xf32> to vector<32x8xf32>
    %cst_25 = arith.constant dense<0.000000e+00> : vector<8x8xf32>
    %22 = tpu.matmul %1, %21, %cst_25 {dimension_numbers = #tpu.dot_dimension_numbers<[1], [0], [0], [1], [0, 0, 1, 1], [], []>} : vector<8x32xf32>, vector<32x8xf32>, vector<8x8xf32> -> vector<8x8xf32>
    %c0_26 = arith.constant 0 : index
    %c3_27 = arith.constant 3 : index
    %c0_28 = arith.constant 0 : index
    %c0_29 = arith.constant 0 : index
    %23 = vector.load %arg5[%c0_26, %c3_27, %c0_28, %c0_29] : memref<1x8x8x8xf32, #tpu.memory_space<vmem>>, vector<1x1x8x8xf32>
    %24 = vector.shape_cast %23 : vector<1x1x8x8xf32> to vector<8x8xf32>
    %25 = vector.shape_cast %22 : vector<8x8xf32> to vector<1x1x8x8xf32>
    tpu.vector_store %arg5[%c0_26, %c3_27, %c0_28, %c0_29], %25 {strides = array<i32>} : memref<1x8x8x8xf32, #tpu.memory_space<vmem>>, vector<1x1x8x8xf32>,
    %c4 = arith.constant 4 : index
    %c0_30 = arith.constant 0 : index
    %c0_31 = arith.constant 0 : index
    %26 = vector.load %arg4[%c4, %c0_30, %c0_31] : memref<8x32x8xf32, #tpu.memory_space<vmem>>, vector<1x32x8xf32>
    %27 = vector.shape_cast %26 : vector<1x32x8xf32> to vector<32x8xf32>
    %cst_32 = arith.constant dense<0.000000e+00> : vector<8x8xf32>
    %28 = tpu.matmul %1, %27, %cst_32 {dimension_numbers = #tpu.dot_dimension_numbers<[1], [0], [0], [1], [0, 0, 1, 1], [], []>} : vector<8x32xf32>, vector<32x8xf32>, vector<8x8xf32> -> vector<8x8xf32>
    %c0_33 = arith.constant 0 : index
    %c4_34 = arith.constant 4 : index
    %c0_35 = arith.constant 0 : index
    %c0_36 = arith.constant 0 : index
    %29 = vector.load %arg5[%c0_33, %c4_34, %c0_35, %c0_36] : memref<1x8x8x8xf32, #tpu.memory_space<vmem>>, vector<1x1x8x8xf32>
    %30 = vector.shape_cast %29 : vector<1x1x8x8xf32> to vector<8x8xf32>
    %31 = vector.shape_cast %28 : vector<8x8xf32> to vector<1x1x8x8xf32>
    tpu.vector_store %arg5[%c0_33, %c4_34, %c0_35, %c0_36], %31 {strides = array<i32>} : memref<1x8x8x8xf32, #tpu.memory_space<vmem>>, vector<1x1x8x8xf32>,
    %c5 = arith.constant 5 : index
    %c0_37 = arith.constant 0 : index
    %c0_38 = arith.constant 0 : index
    %32 = vector.load %arg4[%c5, %c0_37, %c0_38] : memref<8x32x8xf32, #tpu.memory_space<vmem>>, vector<1x32x8xf32>
    %33 = vector.shape_cast %32 : vector<1x32x8xf32> to vector<32x8xf32>
    %cst_39 = arith.constant dense<0.000000e+00> : vector<8x8xf32>
    %34 = tpu.matmul %1, %33, %cst_39 {dimension_numbers = #tpu.dot_dimension_numbers<[1], [0], [0], [1], [0, 0, 1, 1], [], []>} : vector<8x32xf32>, vector<32x8xf32>, vector<8x8xf32> -> vector<8x8xf32>
    %c0_40 = arith.constant 0 : index
    %c5_41 = arith.constant 5 : index
    %c0_42 = arith.constant 0 : index
    %c0_43 = arith.constant 0 : index
    %35 = vector.load %arg5[%c0_40, %c5_41, %c0_42, %c0_43] : memref<1x8x8x8xf32, #tpu.memory_space<vmem>>, vector<1x1x8x8xf32>
    %36 = vector.shape_cast %35 : vector<1x1x8x8xf32> to vector<8x8xf32>
    %37 = vector.shape_cast %34 : vector<8x8xf32> to vector<1x1x8x8xf32>
    tpu.vector_store %arg5[%c0_40, %c5_41, %c0_42, %c0_43], %37 {strides = array<i32>} : memref<1x8x8x8xf32, #tpu.memory_space<vmem>>, vector<1x1x8x8xf32>,
    %c6 = arith.constant 6 : index
    %c0_44 = arith.constant 0 : index
    %c0_45 = arith.constant 0 : index
    %38 = vector.load %arg4[%c6, %c0_44, %c0_45] : memref<8x32x8xf32, #tpu.memory_space<vmem>>, vector<1x32x8xf32>
    %39 = vector.shape_cast %38 : vector<1x32x8xf32> to vector<32x8xf32>
    %cst_46 = arith.constant dense<0.000000e+00> : vector<8x8xf32>
    %40 = tpu.matmul %1, %39, %cst_46 {dimension_numbers = #tpu.dot_dimension_numbers<[1], [0], [0], [1], [0, 0, 1, 1], [], []>} : vector<8x32xf32>, vector<32x8xf32>, vector<8x8xf32> -> vector<8x8xf32>
    %c0_47 = arith.constant 0 : index
    %c6_48 = arith.constant 6 : index
    %c0_49 = arith.constant 0 : index
    %c0_50 = arith.constant 0 : index
    %41 = vector.load %arg5[%c0_47, %c6_48, %c0_49, %c0_50] : memref<1x8x8x8xf32, #tpu.memory_space<vmem>>, vector<1x1x8x8xf32>
    %42 = vector.shape_cast %41 : vector<1x1x8x8xf32> to vector<8x8xf32>
    %43 = vector.shape_cast %40 : vector<8x8xf32> to vector<1x1x8x8xf32>
    tpu.vector_store %arg5[%c0_47, %c6_48, %c0_49, %c0_50], %43 {strides = array<i32>} : memref<1x8x8x8xf32, #tpu.memory_space<vmem>>, vector<1x1x8x8xf32>,
    %c7 = arith.constant 7 : index
    %c0_51 = arith.constant 0 : index
    %c0_52 = arith.constant 0 : index
    %44 = vector.load %arg4[%c7, %c0_51, %c0_52] : memref<8x32x8xf32, #tpu.memory_space<vmem>>, vector<1x32x8xf32>
    %45 = vector.shape_cast %44 : vector<1x32x8xf32> to vector<32x8xf32>
    %cst_53 = arith.constant dense<0.000000e+00> : vector<8x8xf32>
    %46 = tpu.matmul %1, %45, %cst_53 {dimension_numbers = #tpu.dot_dimension_numbers<[1], [0], [0], [1], [0, 0, 1, 1], [], []>} : vector<8x32xf32>, vector<32x8xf32>, vector<8x8xf32> -> vector<8x8xf32>
    %c0_54 = arith.constant 0 : index
    %c7_55 = arith.constant 7 : index
    %c0_56 = arith.constant 0 : index
    %c0_57 = arith.constant 0 : index
    %47 = vector.load %arg5[%c0_54, %c7_55, %c0_56, %c0_57] : memref<1x8x8x8xf32, #tpu.memory_space<vmem>>, vector<1x1x8x8xf32>
    %48 = vector.shape_cast %47 : vector<1x1x8x8xf32> to vector<8x8xf32>
    %49 = vector.shape_cast %46 : vector<8x8xf32> to vector<1x1x8x8xf32>
    tpu.vector_store %arg5[%c0_54, %c7_55, %c0_56, %c0_57], %49 {strides = array<i32>} : memref<1x8x8x8xf32, #tpu.memory_space<vmem>>, vector<1x1x8x8xf32>,
    return
  }
  func.func @transform_0(%arg0: i32, %arg1: i32, %arg2: i32) -> (i32, i32, i32) {
    %c0_i32 = arith.constant 0 : i32
    %c0_i32_0 = arith.constant 0 : i32
    return %arg0, %arg1, %c0_i32 : i32, i32, i32
  }
  func.func @transform_1(%arg0: i32, %arg1: i32, %arg2: i32) -> (i32, i32, i32) {
    %c0_i32 = arith.constant 0 : i32
    %c0_i32_0 = arith.constant 0 : i32
    %c0_i32_1 = arith.constant 0 : i32
    return %arg2, %c0_i32, %c0_i32_0 : i32, i32, i32
  }
  func.func @transform_2(%arg0: i32, %arg1: i32, %arg2: i32) -> (i32, i32, i32, i32) {
    %c0_i32 = arith.constant 0 : i32
    %c0_i32_0 = arith.constant 0 : i32
    return %arg0, %arg2, %arg1, %c0_i32 : i32, i32, i32, i32
  }
}

</mosaic_0001>

<llo_original>
// kernel: tpu_custom_call.1
$region0: #{tpu_custom_call.1}
  #allocation0 [shape = 'u32[]', space=smem, size = 0x4, offset = 0x4, fixed_abs, tag = 'smem constant byte address 0x4 - core index']
  #allocation1 [shape = 'u32[144,128]{1,0:T(1,128)}', space=vmem, size = 0x12000, scoped, tag = 'internal scratch']
  %s0 = inlined_call_operand.vmem [shape: f32[2,8,32], index: 0, kind: input, shape index: {}]
  %s1 = inlined_call_operand.vmem [shape: f32[24,32,8], index: 1, kind: input, shape index: {}]
  %s2 = inlined_call_operand.vmem [shape: f32[2,24,8,8], index: 2, kind: output, shape index: {}]
  %s3 = sld [smem:[#allocation0]]
  $region41: #{tpu_custom_call.1} parent=0
    _
  %s5 = ssub.s32 1, %s3
  %s6 = scalar_select 0, %s5, %s3
  loop: start=0, step=1, limit=8
  $region2: #{tpu_custom_call.1} parent=0 // loop_pre_header
    _
  $region3: #{tpu_custom_call.1} parent=0 // loop_header
    %s8 = sphi 0, %s12
    %p9 = scmp.ge.s32.totalorder %s8, 8
    %s15 = sphi 0, %s34
    %s16 = sphi 0, %s30
    %s17 = sphi 0, %s26
    %s18 = sphi 0, %s15
    %s19 = sphi 0, %s16
    %s20 = sphi 0, %s17
    %s21 = sphi 0, %s18
    %s22 = sphi 0, %s19
    %s23 = sphi 0, %s20
    %s39 = sphi 0, %s41
    %s42 = sphi 0, %s39
    %s43 = sphi 0, %s42
    %s59 = sphi 0, %s43
    %s65 = sphi 0, %s67
    %s68 = sphi 0, %s65
    %s69 = sphi 0, %s68
    %s85 = sphi 0, %s69
    %s95 = sphi 0, %s97
    %s98 = sphi 0, %s95
    %s99 = sphi 0, %s98
    %s115 = sphi 0, %s99
  $region4: #{tpu_custom_call.1} parent=0 // loop_header_branch
    %11 = sbr.rel (%p9) target = $region8
  $region5: #{tpu_custom_call.1} parent=0 // loop_body
    %s13 = ssub.s32 %s8, 1
    %s14 = ssub.s32 %s8, 2
    %s24 = sadd.s32 1, %s17
    %p25 = scmp.ge.s32.totalorder %s24, 3
    %s26 = scalar_select %p25, 0, %s24
    %s27 = sadd.s32 1, %s16
    %s28 = scalar_select %p25, %s27, %s16
    %p29 = scmp.ge.s32.totalorder %s28, 1
    %s30 = scalar_select %p29, 0, %s28
    %s31 = sadd.s32 1, %s15
    %s32 = scalar_select %p29, %s31, %s15
    %p33 = scmp.ge.s32.totalorder %s32, 2
    %s34 = scalar_select %p33, 0, %s32
    %s35 = ssub.s32 %s15, %s34
    %s36 = ssub.s32 %s16, %s30
    %s37 = sor.u32 %s35, %s36
    %p38 = scmp.eq.s32.totalorder %s37, 0
    %s40 = sadd.s32 %s39, 1
    %s41 = scalar_select %p38, %s39, %s40
    %p44 = pneg %p38
    %p45 = scmp.eq.s32.totalorder %s8, 5
    %p46 = por %p44, %p45
    %p47 = scmp.ne.s32.totalorder %s39, %s42
    %p48 = scmp.eq.s32.totalorder %s8, 0
    %p49 = por %p47, %p48
    %p50 = scmp.ne.s32.totalorder %s39, %s42
    %p51 = scmp.eq.s32.totalorder %s13, 5
    %p52 = por %p50, %p51
    %p53 = scmp.ne.s32.totalorder %s42, %s43
    %p54 = scmp.eq.s32.totalorder %s13, 0
    %p55 = por %p53, %p54
    %p56 = scmp.ne.s32.totalorder %s42, %s43
    %p57 = scmp.eq.s32.totalorder %s14, 5
    %p58 = por %p56, %p57
    %p60 = scmp.ne.s32.totalorder %s43, %s59
    %p61 = scmp.eq.s32.totalorder %s14, 0
    %p62 = por %p60, %p61
    %s63 = ssub.s32 %s17, %s26
    %p64 = scmp.eq.s32.totalorder %s63, 0
    %s66 = sadd.s32 %s65, 1
    %s67 = scalar_select %p64, %s65, %s66
    %p70 = pneg %p64
    %p71 = scmp.eq.s32.totalorder %s8, 5
    %p72 = por %p70, %p71
    %p73 = scmp.ne.s32.totalorder %s65, %s68
    %p74 = scmp.eq.s32.totalorder %s8, 0
    %p75 = por %p73, %p74
    %p76 = scmp.ne.s32.totalorder %s65, %s68
    %p77 = scmp.eq.s32.totalorder %s13, 5
    %p78 = por %p76, %p77
    %p79 = scmp.ne.s32.totalorder %s68, %s69
    %p80 = scmp.eq.s32.totalorder %s13, 0
    %p81 = por %p79, %p80
    %p82 = scmp.ne.s32.totalorder %s68, %s69
    %p83 = scmp.eq.s32.totalorder %s14, 5
    %p84 = por %p82, %p83
    %p86 = scmp.ne.s32.totalorder %s69, %s85
    %p87 = scmp.eq.s32.totalorder %s14, 0
    %p88 = por %p86, %p87
    %s89 = ssub.s32 %s15, %s34
    %s90 = ssub.s32 %s17, %s26
    %s91 = sor.u32 %s89, %s90
    %s92 = ssub.s32 %s16, %s30
    %s93 = sor.u32 %s91, %s92
    %p94 = scmp.eq.s32.totalorder %s93, 0
    %s96 = sadd.s32 %s95, 1
    %s97 = scalar_select %p94, %s95, %s96
    %p100 = pneg %p94
    %p101 = scmp.eq.s32.totalorder %s8, 5
    %p102 = por %p100, %p101
    %p103 = scmp.ne.s32.totalorder %s95, %s98
    %p104 = scmp.eq.s32.totalorder %s8, 0
    %p105 = por %p103, %p104
    %p106 = scmp.ne.s32.totalorder %s95, %s98
    %p107 = scmp.eq.s32.totalorder %s13, 5
    %p108 = por %p106, %p107
    %p109 = scmp.ne.s32.totalorder %s98, %s99
    %p110 = scmp.eq.s32.totalorder %s13, 0
    %p111 = por %p109, %p110
    %p112 = scmp.ne.s32.totalorder %s98, %s99
    %p113 = scmp.eq.s32.totalorder %s14, 5
    %p114 = por %p112, %p113
    %p116 = scmp.ne.s32.totalorder %s99, %s115
    %p117 = scmp.eq.s32.totalorder %s14, 0
    %p118 = por %p116, %p117
    %p119 = scmp.le.s32.totalorder 1, %s8
    %p120 = scmp.lt.s32.totalorder %s8, 7
    %p121 = pnand %p119, %p120
    %p122 = pneg %p121
    // Predicated region
    $region9: #{tpu_custom_call.1} parent=5 // pred_check
      _
    $region10: #{tpu_custom_call.1} parent=5 // pred_check_branch
      %124 = sbr.rel (%p121) target = $region12
    $region11: #{tpu_custom_call.1} parent=5 // pred_region
      %s125 = ssub.s32 %s8, 1
    $region12: #{tpu_custom_call.1} parent=5 // pred_fallthru
      _
    %p126 = scmp.lt.s32.totalorder %s8, 6
    // Predicated region
    $region13: #{tpu_custom_call.1} parent=5 // pred_check
      %p127 = pneg %p126
    $region14: #{tpu_custom_call.1} parent=5 // pred_check_branch
      %129 = sbr.rel (%p127) target = $region16
    $region15: #{tpu_custom_call.1} parent=5 // pred_region
      // Predicated region
      $region17: #{tpu_custom_call.1} parent=15 // pred_check
        %p130 = pneg %p49
      $region18: #{tpu_custom_call.1} parent=15 // pred_check_branch
        %132 = sbr.rel (%p130) target = $region20
      $region19: #{tpu_custom_call.1} parent=15 // pred_region
        %p133 = scmp.lt.s32.totalorder %s15, 1
        %s134 = scalar_select %p133, %s15, 1
        %p135 = scmp.lt.s32.totalorder %s16, 0
        %s136 = scalar_select %p135, %s16, 0
        %s137 = sadd.s32 %s136, %s134
        %s138 = smul.addr %s137, 8
        %s139 = scalar_lea.vmem %s0, %s138
      $region20: #{tpu_custom_call.1} parent=15 // pred_fallthru
        _
      // Predicated region
      $region21: #{tpu_custom_call.1} parent=15 // pred_check
        %p140 = pneg %p75
      $region22: #{tpu_custom_call.1} parent=15 // pred_check_branch
        %142 = sbr.rel (%p140) target = $region24
      $region23: #{tpu_custom_call.1} parent=15 // pred_region
        %s143 = smul.u32 8, %s17
        %p144 = scmp.lt.s32.totalorder %s143, 23
        %s145 = scalar_select %p144, %s143, 23
        %s146 = smul.addr %s145, 4
        %s147 = smul.addr %s146, 8
        %s148 = scalar_lea.vmem %s1, %s147
        %s149 = smul.u32 8, %s17
      $region24: #{tpu_custom_call.1} parent=15 // pred_fallthru
        _
    $region16: #{tpu_custom_call.1} parent=5 // pred_fallthru
      _
    %p150 = scmp.le.s32.totalorder 1, %s8
    %p151 = scmp.lt.s32.totalorder %s8, 7
    %p152 = pnand %p150, %p151
    %p153 = pneg %p152
    // Predicated region
    $region25: #{tpu_custom_call.1} parent=5 // pred_check
      _
    $region26: #{tpu_custom_call.1} parent=5 // pred_check_branch
      %155 = sbr.rel (%p152) target = $region28
    $region27: #{tpu_custom_call.1} parent=5 // pred_region
      %s156 = ssub.s32 %s8, 1
      %p157 = scmp.lt.s32.totalorder %s18, 1
      %s158 = scalar_select %p157, %s18, 1
      %p159 = scmp.lt.s32.totalorder %s19, 0
      %s160 = scalar_select %p159, %s19, 0
      %s161 = sadd.s32 %s160, %s158
      %s162 = smul.addr %s161, 8
      %s163 = scalar_lea.vmem %s0, %s162
      %p164 = pneg %p55
      %p165 = pneg %p52
      %s166 = smul.u32 8, %s20
      %p167 = scmp.lt.s32.totalorder %s166, 23
      %s168 = scalar_select %p167, %s166, 23
      %s169 = smul.addr %s168, 4
      %s170 = smul.addr %s169, 8
      %s171 = scalar_lea.vmem %s1, %s170
      %p172 = pneg %p81
      %p173 = pneg %p78
      %p174 = pneg %p111
      %p175 = pneg %p108
      %s176 = smul.u32 8, %s20
      %p177 = scmp.lt.s32.totalorder %s18, 1
      %s178 = scalar_select %p177, %s18, 1
      %p179 = scmp.lt.s32.totalorder %s176, 23
      %s180 = scalar_select %p179, %s176, 23
      %p181 = scmp.lt.s32.totalorder %s19, 0
      %s182 = scalar_select %p181, %s19, 0
      %s183 = sadd.s32 %s182, %s180
      %s184 = smul.addr %s178, 24
      %s185 = sadd.s32 %s183, %s184
      %s186 = smul.addr %s185, 8
      %s187 = scalar_lea.vmem %s2, %s186
      %p188 = scmp.lt.s32.totalorder %s18, 1
      %s189 = scalar_select %p188, %s18, 1
      %p190 = scmp.lt.s32.totalorder %s19, 0
      %s191 = scalar_select %p190, %s19, 0
      %s192 = sadd.s32 %s191, %s189
      %s193 = smul.addr %s192, 8
      %s194 = scalar_lea.vmem %s0, %s193
      %s195 = smul.u32 8, %s20
      %p196 = scmp.lt.s32.totalorder %s195, 23
      %s197 = scalar_select %p196, %s195, 23
      %s198 = smul.addr %s197, 4
      %s199 = smul.addr %s198, 8
      %s200 = scalar_lea.vmem %s1, %s199
      %s201 = smul.u32 8, %s20
      %s202 = smul.u32 8, %s20
      %p203 = scmp.lt.s32.totalorder %s18, 1
      %s204 = scalar_select %p203, %s18, 1
      %p205 = scmp.lt.s32.totalorder %s202, 23
      %s206 = scalar_select %p205, %s202, 23
      %p207 = scmp.lt.s32.totalorder %s19, 0
      %s208 = scalar_select %p207, %s19, 0
      %s209 = sadd.s32 %s208, %s206
      %s210 = smul.addr %s204, 24
      %s211 = sadd.s32 %s209, %s210
      %s212 = smul.addr %s211, 8
      %s213 = scalar_lea.vmem %s2, %s212
      %s214 = smul.u32 8, %s20
      %v215 = vld [vmem:[%s194] sm:$0xff]
      %v216 = vld [vmem:[%s200] sm:$0xff]
      %v217 = vld [vmem:[%s200 + $0x8] sm:$0xff]
      %v218 = vld [vmem:[%s200 + $0x10] sm:$0xff]
      %v219 = vld [vmem:[%s200 + $0x18] sm:$0xff]
      %vm220 = vcmask 261120
      %v222 = vsel %vm220, %v215, 0
      %224 = vmatprep.subr.mxu0 0.0
      %225 = vmatpush1.msra.mxu0 %v216
      %226 = vmatprep.subr.mxu0 0.0
      %227 = vmatpush1.msra.mxu0 %v217
      %228 = vmatprep.subr.mxu0 0.0
      %229 = vmatpush1.msra.mxu0 %v218
      %230 = vmatprep.subr.mxu0 0.0
      %231 = vmatpush1.msra.mxu0 %v219
      %232 = vmatprep.subr.mxu0 0.0
      %233 = vmatpush1.msra.mxu0 0.0
      %234 = vmatprep.subr.mxu0 0.0
      %235 = vmatpush1.msra.mxu0 0.0
      %236 = vmatprep.subr.mxu0 0.0
      %237 = vmatpush1.msra.mxu0 0.0
      %238 = vmatprep.subr.mxu0 0.0
      %239 = vmatpush1.msra.mxu0 0.0
      %240 = vmatprep.subr.mxu0 0.0
      %241 = vmatpush1.msra.mxu0 0.0
      %242 = vmatprep.subr.mxu0 0.0
      %243 = vmatpush1.msra.mxu0 0.0
      %244 = vmatprep.subr.mxu0 0.0
      %245 = vmatpush1.msra.mxu0 0.0
      %246 = vmatprep.subr.mxu0 0.0
      %247 = vmatpush1.msra.mxu0 0.0
      %248 = vmatprep.subr.mxu0 0.0
      %249 = vmatpush1.msra.mxu0 0.0
      %250 = vmatprep.subr.mxu0 0.0
      %251 = vmatpush1.msra.mxu0 0.0
      %252 = vmatprep.subr.mxu0 0.0
      %253 = vmatpush1.msra.mxu0 0.0
      %254 = vmatprep.subr.mxu0 0.0
      %255 = vmatpush1.msra.mxu0 0.0
      %256 = vmatprep.subr.mxu0 0.0
      %257 = vmatpush1.msra.mxu0 0.0
      %258 = vmatprep.subr.mxu0 0.0
      %259 = vmatpush1.msra.mxu0 0.0
      %260 = vmatprep.subr.mxu0 0.0
      %261 = vmatpush1.msra.mxu0 0.0
      %262 = vmatprep.subr.mxu0 0.0
      %263 = vmatpush1.msra.mxu0 0.0
      %264 = vmatprep.subr.mxu0 0.0
      %265 = vmatpush1.msra.mxu0 0.0
      %266 = vmatprep.subr.mxu0 0.0
      %267 = vmatpush1.msra.mxu0 0.0
      %268 = vmatprep.subr.mxu0 0.0
      %269 = vmatpush1.msra.mxu0 0.0
      %270 = vmatprep.subr.mxu0 0.0
      %271 = vmatpush1.msra.mxu0 0.0
      %272 = vmatprep.subr.mxu0 0.0
      %273 = vmatpush1.msra.mxu0 0.0
      %274 = vmatprep.subr.mxu0 0.0
      %275 = vmatpush1.msra.mxu0 0.0
      %276 = vmatprep.subr.mxu0 0.0
      %277 = vmatpush1.msra.mxu0 0.0
      %278 = vmatprep.subr.mxu0 0.0
      %279 = vmatpush1.msra.mxu0 0.0
      %280 = vmatprep.subr.mxu0 0.0
      %281 = vmatpush1.msra.mxu0 0.0
      %282 = vmatprep.subr.mxu0 0.0
      %283 = vmatpush1.msra.mxu0 0.0
      %284 = vmatprep.subr.mxu0 0.0
      %285 = vmatpush1.msra.mxu0 0.0
      %286 = vmatprep.subr.mxu0 0.0
      %287 = vmatpush1.msra.mxu0 0.0
      %288 = vmatprep.mubr.f32.mxu0 0.0
      %289 = vmatmul.mubr.f32.gmra.mrb[0].mxu0 %v222
      %v290 = vpop.f32.mrb[0].mxu0
      %v291 = vadd.f32 0.0, %v290
      %v292 = vpop.f32.mrb[0].mxu0
      %293 = vdwg.mxu0
      %vm294 = vcmask 64512
      %295 = vst.msk [vmem:[%s213] sm:$0xff] %vm294, %v291
      %s296 = scalar_lea.vmem %s200, 32
      %v297 = vld [vmem:[%s296] sm:$0xff]
      %v298 = vld [vmem:[%s296 + $0x8] sm:$0xff]
      %v299 = vld [vmem:[%s296 + $0x10] sm:$0xff]
      %v300 = vld [vmem:[%s296 + $0x18] sm:$0xff]
      %301 = vmatprep.subr.mxu0 0.0
      %302 = vmatpush1.msra.mxu0 %v297
      %303 = vmatprep.subr.mxu0 0.0
      %304 = vmatpush1.msra.mxu0 %v298
      %305 = vmatprep.subr.mxu0 0.0
      %306 = vmatpush1.msra.mxu0 %v299
      %307 = vmatprep.subr.mxu0 0.0
      %308 = vmatpush1.msra.mxu0 %v300
      %309 = vmatprep.subr.mxu0 0.0
      %310 = vmatpush1.msra.mxu0 0.0
      %311 = vmatprep.subr.mxu0 0.0
      %312 = vmatpush1.msra.mxu0 0.0
      %313 = vmatprep.subr.mxu0 0.0
      %314 = vmatpush1.msra.mxu0 0.0
      %315 = vmatprep.subr.mxu0 0.0
      %316 = vmatpush1.msra.mxu0 0.0
      %317 = vmatprep.subr.mxu0 0.0
      %318 = vmatpush1.msra.mxu0 0.0
      %319 = vmatprep.subr.mxu0 0.0
      %320 = vmatpush1.msra.mxu0 0.0
      %321 = vmatprep.subr.mxu0 0.0
      %322 = vmatpush1.msra.mxu0 0.0
      %323 = vmatprep.subr.mxu0 0.0
      %324 = vmatpush1.msra.mxu0 0.0
      %325 = vmatprep.subr.mxu0 0.0
      %326 = vmatpush1.msra.mxu0 0.0
      %327 = vmatprep.subr.mxu0 0.0
      %328 = vmatpush1.msra.mxu0 0.0
      %329 = vmatprep.subr.mxu0 0.0
      %330 = vmatpush1.msra.mxu0 0.0
      %331 = vmatprep.subr.mxu0 0.0
      %332 = vmatpush1.msra.mxu0 0.0
      %333 = vmatprep.subr.mxu0 0.0
      %334 = vmatpush1.msra.mxu0 0.0
      %335 = vmatprep.subr.mxu0 0.0
      %336 = vmatpush1.msra.mxu0 0.0
      %337 = vmatprep.subr.mxu0 0.0
      %338 = vmatpush1.msra.mxu0 0.0
      %339 = vmatprep.subr.mxu0 0.0
      %340 = vmatpush1.msra.mxu0 0.0
      %341 = vmatprep.subr.mxu0 0.0
      %342 = vmatpush1.msra.mxu0 0.0
      %343 = vmatprep.subr.mxu0 0.0
      %344 = vmatpush1.msra.mxu0 0.0
      %345 = vmatprep.subr.mxu0 0.0
      %346 = vmatpush1.msra.mxu0 0.0
      %347 = vmatprep.subr.mxu0 0.0
      %348 = vmatpush1.msra.mxu0 0.0
      %349 = vmatprep.subr.mxu0 0.0
      %350 = vmatpush1.msra.mxu0 0.0
      %351 = vmatprep.subr.mxu0 0.0
      %352 = vmatpush1.msra.mxu0 0.0
      %353 = vmatprep.subr.mxu0 0.0
      %354 = vmatpush1.msra.mxu0 0.0
      %355 = vmatprep.subr.mxu0 0.0
      %356 = vmatpush1.msra.mxu0 0.0
      %357 = vmatprep.subr.mxu0 0.0
      %358 = vmatpush1.msra.mxu0 0.0
      %359 = vmatprep.subr.mxu0 0.0
      %360 = vmatpush1.msra.mxu0 0.0
      %361 = vmatprep.subr.mxu0 0.0
      %362 = vmatpush1.msra.mxu0 0.0
      %363 = vmatprep.subr.mxu0 0.0
      %364 = vmatpush1.msra.mxu0 0.0
      %365 = vmatprep.mubr.f32.mxu0 0.0
      %366 = vmatmul.mubr.f32.gmra.mrb[0].mxu0 %v222
      %v367 = vpop.f32.mrb[0].mxu0
      %v368 = vadd.f32 0.0, %v367
      %v369 = vpop.f32.mrb[0].mxu0
      %370 = vdwg.mxu0
      %s371 = scalar_lea.vmem %s213, 8
      %372 = vst.msk [vmem:[%s371] sm:$0xff] %vm294, %v368
      %s373 = scalar_lea.vmem %s200, 64
      %v374 = vld [vmem:[%s373] sm:$0xff]
      %v375 = vld [vmem:[%s373 + $0x8] sm:$0xff]
      %v376 = vld [vmem:[%s373 + $0x10] sm:$0xff]
      %v377 = vld [vmem:[%s373 + $0x18] sm:$0xff]
      %378 = vmatprep.subr.mxu0 0.0
      %379 = vmatpush1.msra.mxu0 %v374
      %380 = vmatprep.subr.mxu0 0.0
      %381 = vmatpush1.msra.mxu0 %v375
      %382 = vmatprep.subr.mxu0 0.0
      %383 = vmatpush1.msra.mxu0 %v376
      %384 = vmatprep.subr.mxu0 0.0
      %385 = vmatpush1.msra.mxu0 %v377
      %386 = vmatprep.subr.mxu0 0.0
      %387 = vmatpush1.msra.mxu0 0.0
      %388 = vmatprep.subr.mxu0 0.0
      %389 = vmatpush1.msra.mxu0 0.0
      %390 = vmatprep.subr.mxu0 0.0
      %391 = vmatpush1.msra.mxu0 0.0
      %392 = vmatprep.subr.mxu0 0.0
      %393 = vmatpush1.msra.mxu0 0.0
      %394 = vmatprep.subr.mxu0 0.0
      %395 = vmatpush1.msra.mxu0 0.0
      %396 = vmatprep.subr.mxu0 0.0
      %397 = vmatpush1.msra.mxu0 0.0
      %398 = vmatprep.subr.mxu0 0.0
      %399 = vmatpush1.msra.mxu0 0.0
      %400 = vmatprep.subr.mxu0 0.0
      %401 = vmatpush1.msra.mxu0 0.0
      %402 = vmatprep.subr.mxu0 0.0
      %403 = vmatpush1.msra.mxu0 0.0
      %404 = vmatprep.subr.mxu0 0.0
      %405 = vmatpush1.msra.mxu0 0.0
      %406 = vmatprep.subr.mxu0 0.0
      %407 = vmatpush1.msra.mxu0 0.0
      %408 = vmatprep.subr.mxu0 0.0
      %409 = vmatpush1.msra.mxu0 0.0
      %410 = vmatprep.subr.mxu0 0.0
      %411 = vmatpush1.msra.mxu0 0.0
      %412 = vmatprep.subr.mxu0 0.0
      %413 = vmatpush1.msra.mxu0 0.0
      %414 = vmatprep.subr.mxu0 0.0
      %415 = vmatpush1.msra.mxu0 0.0
      %416 = vmatprep.subr.mxu0 0.0
      %417 = vmatpush1.msra.mxu0 0.0
      %418 = vmatprep.subr.mxu0 0.0
      %419 = vmatpush1.msra.mxu0 0.0
      %420 = vmatprep.subr.mxu0 0.0
      %421 = vmatpush1.msra.mxu0 0.0
      %422 = vmatprep.subr.mxu0 0.0
      %423 = vmatpush1.msra.mxu0 0.0
      %424 = vmatprep.subr.mxu0 0.0
      %425 = vmatpush1.msra.mxu0 0.0
      %426 = vmatprep.subr.mxu0 0.0
      %427 = vmatpush1.msra.mxu0 0.0
      %428 = vmatprep.subr.mxu0 0.0
      %429 = vmatpush1.msra.mxu0 0.0
      %430 = vmatprep.subr.mxu0 0.0
      %431 = vmatpush1.msra.mxu0 0.0
      %432 = vmatprep.subr.mxu0 0.0
      %433 = vmatpush1.msra.mxu0 0.0
      %434 = vmatprep.subr.mxu0 0.0
      %435 = vmatpush1.msra.mxu0 0.0
      %436 = vmatprep.subr.mxu0 0.0
      %437 = vmatpush1.msra.mxu0 0.0
      %438 = vmatprep.subr.mxu0 0.0
      %439 = vmatpush1.msra.mxu0 0.0
      %440 = vmatprep.subr.mxu0 0.0
      %441 = vmatpush1.msra.mxu0 0.0
      %442 = vmatprep.mubr.f32.mxu0 0.0
      %443 = vmatmul.mubr.f32.gmra.mrb[0].mxu0 %v222
      %v444 = vpop.f32.mrb[0].mxu0
      %v445 = vadd.f32 0.0, %v444
      %v446 = vpop.f32.mrb[0].mxu0
      %447 = vdwg.mxu0
      %s448 = scalar_lea.vmem %s213, 16
      %449 = vst.msk [vmem:[%s448] sm:$0xff] %vm294, %v445
      %s450 = scalar_lea.vmem %s200, 96
      %v451 = vld [vmem:[%s450] sm:$0xff]
      %v452 = vld [vmem:[%s450 + $0x8] sm:$0xff]
      %v453 = vld [vmem:[%s450 + $0x10] sm:$0xff]
      %v454 = vld [vmem:[%s450 + $0x18] sm:$0xff]
      %455 = vmatprep.subr.mxu0 0.0
      %456 = vmatpush1.msra.mxu0 %v451
      %457 = vmatprep.subr.mxu0 0.0
      %458 = vmatpush1.msra.mxu0 %v452
      %459 = vmatprep.subr.mxu0 0.0
      %460 = vmatpush1.msra.mxu0 %v453
      %461 = vmatprep.subr.mxu0 0.0
      %462 = vmatpush1.msra.mxu0 %v454
      %463 = vmatprep.subr.mxu0 0.0
      %464 = vmatpush1.msra.mxu0 0.0
      %465 = vmatprep.subr.mxu0 0.0
      %466 = vmatpush1.msra.mxu0 0.0
      %467 = vmatprep.subr.mxu0 0.0
      %468 = vmatpush1.msra.mxu0 0.0
      %469 = vmatprep.subr.mxu0 0.0
      %470 = vmatpush1.msra.mxu0 0.0
      %471 = vmatprep.subr.mxu0 0.0
      %472 = vmatpush1.msra.mxu0 0.0
      %473 = vmatprep.subr.mxu0 0.0
      %474 = vmatpush1.msra.mxu0 0.0
      %475 = vmatprep.subr.mxu0 0.0
      %476 = vmatpush1.msra.mxu0 0.0
      %477 = vmatprep.subr.mxu0 0.0
      %478 = vmatpush1.msra.mxu0 0.0
      %479 = vmatprep.subr.mxu0 0.0
      %480 = vmatpush1.msra.mxu0 0.0
      %481 = vmatprep.subr.mxu0 0.0
      %482 = vmatpush1.msra.mxu0 0.0
      %483 = vmatprep.subr.mxu0 0.0
      %484 = vmatpush1.msra.mxu0 0.0
      %485 = vmatprep.subr.mxu0 0.0
      %486 = vmatpush1.msra.mxu0 0.0
      %487 = vmatprep.subr.mxu0 0.0
      %488 = vmatpush1.msra.mxu0 0.0
      %489 = vmatprep.subr.mxu0 0.0
      %490 = vmatpush1.msra.mxu0 0.0
      %491 = vmatprep.subr.mxu0 0.0
      %492 = vmatpush1.msra.mxu0 0.0
      %493 = vmatprep.subr.mxu0 0.0
      %494 = vmatpush1.msra.mxu0 0.0
      %495 = vmatprep.subr.mxu0 0.0
      %496 = vmatpush1.msra.mxu0 0.0
      %497 = vmatprep.subr.mxu0 0.0
      %498 = vmatpush1.msra.mxu0 0.0
      %499 = vmatprep.subr.mxu0 0.0
      %500 = vmatpush1.msra.mxu0 0.0
      %501 = vmatprep.subr.mxu0 0.0
      %502 = vmatpush1.msra.mxu0 0.0
      %503 = vmatprep.subr.mxu0 0.0
      %504 = vmatpush1.msra.mxu0 0.0
      %505 = vmatprep.subr.mxu0 0.0
      %506 = vmatpush1.msra.mxu0 0.0
      %507 = vmatprep.subr.mxu0 0.0
      %508 = vmatpush1.msra.mxu0 0.0
      %509 = vmatprep.subr.mxu0 0.0
      %510 = vmatpush1.msra.mxu0 0.0
      %511 = vmatprep.subr.mxu0 0.0
      %512 = vmatpush1.msra.mxu0 0.0
      %513 = vmatprep.subr.mxu0 0.0
      %514 = vmatpush1.msra.mxu0 0.0
      %515 = vmatprep.subr.mxu0 0.0
      %516 = vmatpush1.msra.mxu0 0.0
      %517 = vmatprep.subr.mxu0 0.0
      %518 = vmatpush1.msra.mxu0 0.0
      %519 = vmatprep.mubr.f32.mxu0 0.0
      %520 = vmatmul.mubr.f32.gmra.mrb[0].mxu0 %v222
      %v521 = vpop.f32.mrb[0].mxu0
      %v522 = vadd.f32 0.0, %v521
      %v523 = vpop.f32.mrb[0].mxu0
      %524 = vdwg.mxu0
      %s525 = scalar_lea.vmem %s213, 24
      %526 = vst.msk [vmem:[%s525] sm:$0xff] %vm294, %v522
      %s527 = scalar_lea.vmem %s200, 128
      %v528 = vld [vmem:[%s527] sm:$0xff]
      %v529 = vld [vmem:[%s527 + $0x8] sm:$0xff]
      %v530 = vld [vmem:[%s527 + $0x10] sm:$0xff]
      %v531 = vld [vmem:[%s527 + $0x18] sm:$0xff]
      %532 = vmatprep.subr.mxu0 0.0
      %533 = vmatpush1.msra.mxu0 %v528
      %534 = vmatprep.subr.mxu0 0.0
      %535 = vmatpush1.msra.mxu0 %v529
      %536 = vmatprep.subr.mxu0 0.0
      %537 = vmatpush1.msra.mxu0 %v530
      %538 = vmatprep.subr.mxu0 0.0
      %539 = vmatpush1.msra.mxu0 %v531
      %540 = vmatprep.subr.mxu0 0.0
      %541 = vmatpush1.msra.mxu0 0.0
      %542 = vmatprep.subr.mxu0 0.0
      %543 = vmatpush1.msra.mxu0 0.0
      %544 = vmatprep.subr.mxu0 0.0
      %545 = vmatpush1.msra.mxu0 0.0
      %546 = vmatprep.subr.mxu0 0.0
      %547 = vmatpush1.msra.mxu0 0.0
      %548 = vmatprep.subr.mxu0 0.0
      %549 = vmatpush1.msra.mxu0 0.0
      %550 = vmatprep.subr.mxu0 0.0
      %551 = vmatpush1.msra.mxu0 0.0
      %552 = vmatprep.subr.mxu0 0.0
      %553 = vmatpush1.msra.mxu0 0.0
      %554 = vmatprep.subr.mxu0 0.0
      %555 = vmatpush1.msra.mxu0 0.0
      %556 = vmatprep.subr.mxu0 0.0
      %557 = vmatpush1.msra.mxu0 0.0
      %558 = vmatprep.subr.mxu0 0.0
      %559 = vmatpush1.msra.mxu0 0.0
      %560 = vmatprep.subr.mxu0 0.0
      %561 = vmatpush1.msra.mxu0 0.0
      %562 = vmatprep.subr.mxu0 0.0
      %563 = vmatpush1.msra.mxu0 0.0
      %564 = vmatprep.subr.mxu0 0.0
      %565 = vmatpush1.msra.mxu0 0.0
      %566 = vmatprep.subr.mxu0 0.0
      %567 = vmatpush1.msra.mxu0 0.0
      %568 = vmatprep.subr.mxu0 0.0
      %569 = vmatpush1.msra.mxu0 0.0
      %570 = vmatprep.subr.mxu0 0.0
      %571 = vmatpush1.msra.mxu0 0.0
      %572 = vmatprep.subr.mxu0 0.0
      %573 = vmatpush1.msra.mxu0 0.0
      %574 = vmatprep.subr.mxu0 0.0
      %575 = vmatpush1.msra.mxu0 0.0
      %576 = vmatprep.subr.mxu0 0.0
      %577 = vmatpush1.msra.mxu0 0.0
      %578 = vmatprep.subr.mxu0 0.0
      %579 = vmatpush1.msra.mxu0 0.0
      %580 = vmatprep.subr.mxu0 0.0
      %581 = vmatpush1.msra.mxu0 0.0
      %582 = vmatprep.subr.mxu0 0.0
      %583 = vmatpush1.msra.mxu0 0.0
      %584 = vmatprep.subr.mxu0 0.0
      %585 = vmatpush1.msra.mxu0 0.0
      %586 = vmatprep.subr.mxu0 0.0
      %587 = vmatpush1.msra.mxu0 0.0
      %588 = vmatprep.subr.mxu0 0.0
      %589 = vmatpush1.msra.mxu0 0.0
      %590 = vmatprep.subr.mxu0 0.0
      %591 = vmatpush1.msra.mxu0 0.0
      %592 = vmatprep.subr.mxu0 0.0
      %593 = vmatpush1.msra.mxu0 0.0
      %594 = vmatprep.subr.mxu0 0.0
      %595 = vmatpush1.msra.mxu0 0.0
      %596 = vmatprep.mubr.f32.mxu0 0.0
      %597 = vmatmul.mubr.f32.gmra.mrb[0].mxu0 %v222
      %v598 = vpop.f32.mrb[0].mxu0
      %v599 = vadd.f32 0.0, %v598
      %v600 = vpop.f32.mrb[0].mxu0
      %601 = vdwg.mxu0
      %s602 = scalar_lea.vmem %s213, 32
      %603 = vst.msk [vmem:[%s602] sm:$0xff] %vm294, %v599
      %s604 = scalar_lea.vmem %s200, 160
      %v605 = vld [vmem:[%s604] sm:$0xff]
      %v606 = vld [vmem:[%s604 + $0x8] sm:$0xff]
      %v607 = vld [vmem:[%s604 + $0x10] sm:$0xff]
      %v608 = vld [vmem:[%s604 + $0x18] sm:$0xff]
      %609 = vmatprep.subr.mxu0 0.0
      %610 = vmatpush1.msra.mxu0 %v605
      %611 = vmatprep.subr.mxu0 0.0
      %612 = vmatpush1.msra.mxu0 %v606
      %613 = vmatprep.subr.mxu0 0.0
      %614 = vmatpush1.msra.mxu0 %v607
      %615 = vmatprep.subr.mxu0 0.0
      %616 = vmatpush1.msra.mxu0 %v608
      %617 = vmatprep.subr.mxu0 0.0
      %618 = vmatpush1.msra.mxu0 0.0
      %619 = vmatprep.subr.mxu0 0.0
      %620 = vmatpush1.msra.mxu0 0.0
      %621 = vmatprep.subr.mxu0 0.0
      %622 = vmatpush1.msra.mxu0 0.0
      %623 = vmatprep.subr.mxu0 0.0
      %624 = vmatpush1.msra.mxu0 0.0
      %625 = vmatprep.subr.mxu0 0.0
      %626 = vmatpush1.msra.mxu0 0.0
      %627 = vmatprep.subr.mxu0 0.0
      %628 = vmatpush1.msra.mxu0 0.0
      %629 = vmatprep.subr.mxu0 0.0
      %630 = vmatpush1.msra.mxu0 0.0
      %631 = vmatprep.subr.mxu0 0.0
      %632 = vmatpush1.msra.mxu0 0.0
      %633 = vmatprep.subr.mxu0 0.0
      %634 = vmatpush1.msra.mxu0 0.0
      %635 = vmatprep.subr.mxu0 0.0
      %636 = vmatpush1.msra.mxu0 0.0
      %637 = vmatprep.subr.mxu0 0.0
      %638 = vmatpush1.msra.mxu0 0.0
      %639 = vmatprep.subr.mxu0 0.0
      %640 = vmatpush1.msra.mxu0 0.0
      %641 = vmatprep.subr.mxu0 0.0
      %642 = vmatpush1.msra.mxu0 0.0
      %643 = vmatprep.subr.mxu0 0.0
      %644 = vmatpush1.msra.mxu0 0.0
      %645 = vmatprep.subr.mxu0 0.0
      %646 = vmatpush1.msra.mxu0 0.0
      %647 = vmatprep.subr.mxu0 0.0
      %648 = vmatpush1.msra.mxu0 0.0
      %649 = vmatprep.subr.mxu0 0.0
      %650 = vmatpush1.msra.mxu0 0.0
      %651 = vmatprep.subr.mxu0 0.0
      %652 = vmatpush1.msra.mxu0 0.0
      %653 = vmatprep.subr.mxu0 0.0
      %654 = vmatpush1.msra.mxu0 0.0
      %655 = vmatprep.subr.mxu0 0.0
      %656 = vmatpush1.msra.mxu0 0.0
      %657 = vmatprep.subr.mxu0 0.0
      %658 = vmatpush1.msra.mxu0 0.0
      %659 = vmatprep.subr.mxu0 0.0
      %660 = vmatpush1.msra.mxu0 0.0
      %661 = vmatprep.subr.mxu0 0.0
      %662 = vmatpush1.msra.mxu0 0.0
      %663 = vmatprep.subr.mxu0 0.0
      %664 = vmatpush1.msra.mxu0 0.0
      %665 = vmatprep.subr.mxu0 0.0
      %666 = vmatpush1.msra.mxu0 0.0
      %667 = vmatprep.subr.mxu0 0.0
      %668 = vmatpush1.msra.mxu0 0.0
      %669 = vmatprep.subr.mxu0 0.0
      %670 = vmatpush1.msra.mxu0 0.0
      %671 = vmatprep.subr.mxu0 0.0
      %672 = vmatpush1.msra.mxu0 0.0
      %673 = vmatprep.mubr.f32.mxu0 0.0
      %674 = vmatmul.mubr.f32.gmra.mrb[0].mxu0 %v222
      %v675 = vpop.f32.mrb[0].mxu0
      %v676 = vadd.f32 0.0, %v675
      %v677 = vpop.f32.mrb[0].mxu0
      %678 = vdwg.mxu0
      %s679 = scalar_lea.vmem %s213, 40
      %680 = vst.msk [vmem:[%s679] sm:$0xff] %vm294, %v676
      %s681 = scalar_lea.vmem %s200, 192
      %v682 = vld [vmem:[%s681] sm:$0xff]
      %v683 = vld [vmem:[%s681 + $0x8] sm:$0xff]
      %v684 = vld [vmem:[%s681 + $0x10] sm:$0xff]
      %v685 = vld [vmem:[%s681 + $0x18] sm:$0xff]
      %686 = vmatprep.subr.mxu0 0.0
      %687 = vmatpush1.msra.mxu0 %v682
      %688 = vmatprep.subr.mxu0 0.0
      %689 = vmatpush1.msra.mxu0 %v683
      %690 = vmatprep.subr.mxu0 0.0
      %691 = vmatpush1.msra.mxu0 %v684
      %692 = vmatprep.subr.mxu0 0.0
      %693 = vmatpush1.msra.mxu0 %v685
      %694 = vmatprep.subr.mxu0 0.0
      %695 = vmatpush1.msra.mxu0 0.0
      %696 = vmatprep.subr.mxu0 0.0
      %697 = vmatpush1.msra.mxu0 0.0
      %698 = vmatprep.subr.mxu0 0.0
      %699 = vmatpush1.msra.mxu0 0.0
      %700 = vmatprep.subr.mxu0 0.0
      %701 = vmatpush1.msra.mxu0 0.0
      %702 = vmatprep.subr.mxu0 0.0
      %703 = vmatpush1.msra.mxu0 0.0
      %704 = vmatprep.subr.mxu0 0.0
      %705 = vmatpush1.msra.mxu0 0.0
      %706 = vmatprep.subr.mxu0 0.0
      %707 = vmatpush1.msra.mxu0 0.0
      %708 = vmatprep.subr.mxu0 0.0
      %709 = vmatpush1.msra.mxu0 0.0
      %710 = vmatprep.subr.mxu0 0.0
      %711 = vmatpush1.msra.mxu0 0.0
      %712 = vmatprep.subr.mxu0 0.0
      %713 = vmatpush1.msra.mxu0 0.0
      %714 = vmatprep.subr.mxu0 0.0
      %715 = vmatpush1.msra.mxu0 0.0
      %716 = vmatprep.subr.mxu0 0.0
      %717 = vmatpush1.msra.mxu0 0.0
      %718 = vmatprep.subr.mxu0 0.0
      %719 = vmatpush1.msra.mxu0 0.0
      %720 = vmatprep.subr.mxu0 0.0
      %721 = vmatpush1.msra.mxu0 0.0
      %722 = vmatprep.subr.mxu0 0.0
      %723 = vmatpush1.msra.mxu0 0.0
      %724 = vmatprep.subr.mxu0 0.0
      %725 = vmatpush1.msra.mxu0 0.0
      %726 = vmatprep.subr.mxu0 0.0
      %727 = vmatpush1.msra.mxu0 0.0
      %728 = vmatprep.subr.mxu0 0.0
      %729 = vmatpush1.msra.mxu0 0.0
      %730 = vmatprep.subr.mxu0 0.0
      %731 = vmatpush1.msra.mxu0 0.0
      %732 = vmatprep.subr.mxu0 0.0
      %733 = vmatpush1.msra.mxu0 0.0
      %734 = vmatprep.subr.mxu0 0.0
      %735 = vmatpush1.msra.mxu0 0.0
      %736 = vmatprep.subr.mxu0 0.0
      %737 = vmatpush1.msra.mxu0 0.0
      %738 = vmatprep.subr.mxu0 0.0
      %739 = vmatpush1.msra.mxu0 0.0
      %740 = vmatprep.subr.mxu0 0.0
      %741 = vmatpush1.msra.mxu0 0.0
      %742 = vmatprep.subr.mxu0 0.0
      %743 = vmatpush1.msra.mxu0 0.0
      %744 = vmatprep.subr.mxu0 0.0
      %745 = vmatpush1.msra.mxu0 0.0
      %746 = vmatprep.subr.mxu0 0.0
      %747 = vmatpush1.msra.mxu0 0.0
      %748 = vmatprep.subr.mxu0 0.0
      %749 = vmatpush1.msra.mxu0 0.0
      %750 = vmatprep.mubr.f32.mxu0 0.0
      %751 = vmatmul.mubr.f32.gmra.mrb[0].mxu0 %v222
      %v752 = vpop.f32.mrb[0].mxu0
      %v753 = vadd.f32 0.0, %v752
      %v754 = vpop.f32.mrb[0].mxu0
      %755 = vdwg.mxu0
      %s756 = scalar_lea.vmem %s213, 48
      %757 = vst.msk [vmem:[%s756] sm:$0xff] %vm294, %v753
      %s758 = scalar_lea.vmem %s200, 224
      %v759 = vld [vmem:[%s758] sm:$0xff]
      %v760 = vld [vmem:[%s758 + $0x8] sm:$0xff]
      %v761 = vld [vmem:[%s758 + $0x10] sm:$0xff]
      %v762 = vld [vmem:[%s758 + $0x18] sm:$0xff]
      %763 = vmatprep.subr.mxu0 0.0
      %764 = vmatpush1.msra.mxu0 %v759
      %765 = vmatprep.subr.mxu0 0.0
      %766 = vmatpush1.msra.mxu0 %v760
      %767 = vmatprep.subr.mxu0 0.0
      %768 = vmatpush1.msra.mxu0 %v761
      %769 = vmatprep.subr.mxu0 0.0
      %770 = vmatpush1.msra.mxu0 %v762
      %771 = vmatprep.subr.mxu0 0.0
      %772 = vmatpush1.msra.mxu0 0.0
      %773 = vmatprep.subr.mxu0 0.0
      %774 = vmatpush1.msra.mxu0 0.0
      %775 = vmatprep.subr.mxu0 0.0
      %776 = vmatpush1.msra.mxu0 0.0
      %777 = vmatprep.subr.mxu0 0.0
      %778 = vmatpush1.msra.mxu0 0.0
      %779 = vmatprep.subr.mxu0 0.0
      %780 = vmatpush1.msra.mxu0 0.0
      %781 = vmatprep.subr.mxu0 0.0
      %782 = vmatpush1.msra.mxu0 0.0
      %783 = vmatprep.subr.mxu0 0.0
      %784 = vmatpush1.msra.mxu0 0.0
      %785 = vmatprep.subr.mxu0 0.0
      %786 = vmatpush1.msra.mxu0 0.0
      %787 = vmatprep.subr.mxu0 0.0
      %788 = vmatpush1.msra.mxu0 0.0
      %789 = vmatprep.subr.mxu0 0.0
      %790 = vmatpush1.msra.mxu0 0.0
      %791 = vmatprep.subr.mxu0 0.0
      %792 = vmatpush1.msra.mxu0 0.0
      %793 = vmatprep.subr.mxu0 0.0
      %794 = vmatpush1.msra.mxu0 0.0
      %795 = vmatprep.subr.mxu0 0.0
      %796 = vmatpush1.msra.mxu0 0.0
      %797 = vmatprep.subr.mxu0 0.0
      %798 = vmatpush1.msra.mxu0 0.0
      %799 = vmatprep.subr.mxu0 0.0
      %800 = vmatpush1.msra.mxu0 0.0
      %801 = vmatprep.subr.mxu0 0.0
      %802 = vmatpush1.msra.mxu0 0.0
      %803 = vmatprep.subr.mxu0 0.0
      %804 = vmatpush1.msra.mxu0 0.0
      %805 = vmatprep.subr.mxu0 0.0
      %806 = vmatpush1.msra.mxu0 0.0
      %807 = vmatprep.subr.mxu0 0.0
      %808 = vmatpush1.msra.mxu0 0.0
      %809 = vmatprep.subr.mxu0 0.0
      %810 = vmatpush1.msra.mxu0 0.0
      %811 = vmatprep.subr.mxu0 0.0
      %812 = vmatpush1.msra.mxu0 0.0
      %813 = vmatprep.subr.mxu0 0.0
      %814 = vmatpush1.msra.mxu0 0.0
      %815 = vmatprep.subr.mxu0 0.0
      %816 = vmatpush1.msra.mxu0 0.0
      %817 = vmatprep.subr.mxu0 0.0
      %818 = vmatpush1.msra.mxu0 0.0
      %819 = vmatprep.subr.mxu0 0.0
      %820 = vmatpush1.msra.mxu0 0.0
      %821 = vmatprep.subr.mxu0 0.0
      %822 = vmatpush1.msra.mxu0 0.0
      %823 = vmatprep.subr.mxu0 0.0
      %824 = vmatpush1.msra.mxu0 0.0
      %825 = vmatprep.subr.mxu0 0.0
      %826 = vmatpush1.msra.mxu0 0.0
      %827 = vmatprep.mubr.f32.mxu0 0.0
      %828 = vmatmul.mubr.f32.gmra.mrb[0].mxu0 %v222
      %v829 = vpop.f32.mrb[0].mxu0
      %v830 = vadd.f32 0.0, %v829
      %v831 = vpop.f32.mrb[0].mxu0
      %832 = vdwg.mxu0
      %s833 = scalar_lea.vmem %s213, 56
      %834 = vst.msk [vmem:[%s833] sm:$0xff] %vm294, %v830
      %s835 = smul.u32 8, %s20
      %p836 = scmp.lt.s32.totalorder %s18, 1
      %s837 = scalar_select %p836, %s18, 1
      %p838 = scmp.lt.s32.totalorder %s835, 23
      %s839 = scalar_select %p838, %s835, 23
      %p840 = scmp.lt.s32.totalorder %s19, 0
      %s841 = scalar_select %p840, %s19, 0
      %s842 = sadd.s32 %s841, %s839
      %s843 = smul.addr %s837, 24
      %s844 = sadd.s32 %s842, %s843
      %s845 = smul.addr %s844, 8
      %s846 = scalar_lea.vmem %s2, %s845
      // Predicated region
      $region29: #{tpu_custom_call.1} parent=27 // pred_check
        %p847 = pneg %p108
      $region30: #{tpu_custom_call.1} parent=27 // pred_check_branch
        %849 = sbr.rel (%p847) target = $region32
      $region31: #{tpu_custom_call.1} parent=27 // pred_region
        %s850 = smul.u32 8, %s20
      $region32: #{tpu_custom_call.1} parent=27 // pred_fallthru
        _
    $region28: #{tpu_custom_call.1} parent=5 // pred_fallthru
      _
    %p851 = scmp.le.s32.totalorder 2, %s8
    // Predicated region
    $region33: #{tpu_custom_call.1} parent=5 // pred_check
      %p852 = pneg %p851
    $region34: #{tpu_custom_call.1} parent=5 // pred_check_branch
      %854 = sbr.rel (%p852) target = $region36
    $region35: #{tpu_custom_call.1} parent=5 // pred_region
      %s855 = ssub.s32 %s8, 2
      // Predicated region
      $region37: #{tpu_custom_call.1} parent=35 // pred_check
        %p856 = pneg %p114
      $region38: #{tpu_custom_call.1} parent=35 // pred_check_branch
        %858 = sbr.rel (%p856) target = $region40
      $region39: #{tpu_custom_call.1} parent=35 // pred_region
        %s859 = smul.u32 8, %s23
        %p860 = scmp.lt.s32.totalorder %s21, 1
        %s861 = scalar_select %p860, %s21, 1
        %p862 = scmp.lt.s32.totalorder %s859, 23
        %s863 = scalar_select %p862, %s859, 23
        %p864 = scmp.lt.s32.totalorder %s22, 0
        %s865 = scalar_select %p864, %s22, 0
        %s866 = sadd.s32 %s865, %s863
        %s867 = smul.addr %s861, 24
        %s868 = sadd.s32 %s866, %s867
        %s869 = smul.addr %s868, 8
        %s870 = scalar_lea.vmem %s2, %s869
      $region40: #{tpu_custom_call.1} parent=35 // pred_fallthru
        _
    $region36: #{tpu_custom_call.1} parent=5 // pred_fallthru
      _
  $region6: #{tpu_custom_call.1} parent=0 // loop_footer
    %s12 = sadd.s32 1, %s8
  $region7: #{tpu_custom_call.1} parent=0 // loop_footer_branch
    %7 = sbr.rel target = $region3
  $region8: #{tpu_custom_call.1} parent=0 // loop_exit
    _

</llo_original>
